<compile_context>
chip_gen: v6e
topology: v6e:2x2x1
jax: 0.10.0
libtpu: 0.0.40
codegen_flags: <defaults>
</compile_context>

<pallas_src>
import functools

import jax
import jax.numpy as jnp
from jax.experimental import pallas as pl
from jax.experimental.pallas import tpu as pltpu


def _cdiv(a, b):
    return -(-a // b)


def _tpu_generation():
    """Best-effort TPU generation (5, 6, 7, ...); 0 if unknown."""
    try:
        kind = str(jax.devices()[0].device_kind)
    except Exception:
        return 0
    for ch in kind:
        if ch.isdigit():
            return int(ch)
    return 0


def layernorm_kernel(x_ref, gamma_ref, beta_ref, o_ref, *, eps, d_model):
    x = x_ref[...].astype(jnp.float32)                    # (tm, d)
    # Two-pass variance: the extra XLU reduction is VMEM-local and completely
    # hidden under the HBM stream; avoids E[x^2]-E[x]^2 cancellation.
    mean = jnp.sum(x, axis=-1, keepdims=True) * (1.0 / d_model)   # (tm, 1)
    diff = x - mean
    # Unbiased (Bessel-corrected) variance, eps added to std (reference LayerNorm
    # convention; note torch.nn.LayerNorm uses biased variance with eps inside).
    var = jnp.sum(diff * diff, axis=-1, keepdims=True) * (1.0 / (d_model - 1))
    std = jnp.sqrt(var)
    inv = 1.0 / (std + eps)                               # exact; (tm, 1) -> cheap
    gamma = gamma_ref[...].astype(jnp.float32)            # (1, d)
    beta = beta_ref[...].astype(jnp.float32)              # (1, d)
    out = diff * inv * gamma + beta
    o_ref[...] = out.astype(o_ref.dtype)


def layer_norm(x, gamma, beta, *, eps=1e-6, target_block_bytes=4 * 1024 * 1024):
    """x: (..., d_model); gamma, beta: (d_model,)."""
    orig_shape = x.shape
    d_model = orig_shape[-1]
    x2 = x.reshape(-1, d_model)
    rows = x2.shape[0]

    itemsize = jnp.dtype(x.dtype).itemsize
    # Sublane packing: 8 rows for 4-byte dtypes, 16 for bf16, 32 for 1-byte dtypes.
    pack = max(8, 32 // itemsize)

    gen = _tpu_generation()

    # --- Tile sizing by block bytes (pure HBM streaming op). ----------------------
    bytes_per_row = d_model * itemsize
    tile = min(rows, max(1, target_block_bytes // bytes_per_row))

    # VMEM footprint per row of tile: 2x in + 2x out double-buffered blocks, plus the
    # f32 upcast temporaries (x_f32 and the f32 result before downcast) when the
    # input dtype is narrower than 4 bytes.
    buf_bytes_per_row = 4 * d_model * itemsize
    if itemsize < 4:
        buf_bytes_per_row += 2 * d_model * 4
    # v7x has only 64 MiB physical VMEM per TC: keep the working set <= ~16 MiB.
    # v5e/v6e (128 MiB) get a little more headroom, still far below the scoped limit.
    vmem_budget = (16 if gen >= 7 else 24) * 1024 * 1024
    tile = min(tile, max(1, vmem_budget // buf_bytes_per_row))

    if tile >= pack:
        tile = (tile // pack) * pack      # sublane-aligned row tile
    else:
        tile = rows                        # rows < pack: full-extent block is allowed

    # --- v7x only: two TensorCores share the grid via "parallel" semantics. --------
    # Keep the number of grid steps even so neither TC idles on a ragged last step.
    # On v5e/v6e (single TC) splitting only adds per-step overhead, so leave it off.
    if gen >= 7 and rows > pack and tile >= pack:
        t = tile
        while t > pack and _cdiv(rows, t) % 2 != 0:
            t -= pack
        if _cdiv(rows, t) % 2 == 0:
            tile = t

    # No jnp.pad (that would be a full extra HBM read+write of the activation): rows
    # are independent, so the ragged last block is handled by the pipeline.
    grid = (_cdiv(rows, tile),)

    # vmem limit from actual buffer bytes (+ gamma/beta + internal scratch headroom).
    needed = tile * buf_bytes_per_row + 4 * d_model * 4
    vmem_limit_bytes = min(32 * 1024 * 1024,
                           max(4 * 1024 * 1024, int(needed * 1.25) + (2 << 20)))

    gamma2 = gamma.reshape(1, d_model)
    beta2 = beta.reshape(1, d_model)

    # NOTE: keep d_model a multiple of 128 in real transformer configs so output
    # stores stay lane-dense (unmasked vst).  If d_model is very large (few rows per
    # tile) and DMA latency is exposed, pipeline_mode=pl.Buffered(3) on the x spec
    # can recover a few percent on v6e (cheap VMEM there).
    kernel = functools.partial(layernorm_kernel, eps=eps, d_model=d_model)
    out = pl.pallas_call(
        kernel,
        out_shape=jax.ShapeDtypeStruct((rows, d_model), x.dtype),
        grid_spec=pltpu.PrefetchScalarGridSpec(
            num_scalar_prefetch=0,
            grid=grid,
            in_specs=[
                pl.BlockSpec((tile, d_model), lambda i: (i, 0)),
                pl.BlockSpec((1, d_model), lambda i: (0, 0)),
                pl.BlockSpec((1, d_model), lambda i: (0, 0)),
            ],
            out_specs=pl.BlockSpec((tile, d_model), lambda i: (i, 0)),
        ),
        compiler_params=pltpu.CompilerParams(
            dimension_semantics=("parallel",),
            vmem_limit_bytes=vmem_limit_bytes,
        ),
    )(x2, gamma2, beta2)

    return out.reshape(orig_shape)


if __name__ == "__main__":
    batch, seq, d_model = 2, 8, 128   # d_model multiple of 128 -> lane-dense stores
    key = jax.random.PRNGKey(0)
    x = jax.random.normal(key, (batch, seq, d_model), dtype=jnp.float32)

    # Deterministic parameters matching nn.Parameter(torch.ones/zeros(d_model)).
    gamma = jnp.ones((d_model,), dtype=jnp.float32)
    beta = jnp.zeros((d_model,), dtype=jnp.float32)

    out = layer_norm(x, gamma, beta, eps=1e-6)
    out = jax.block_until_ready(out)

    # Reference check in plain JAX (unbiased std, eps added to std).
    mean = jnp.mean(x, axis=-1, keepdims=True)
    std = jnp.sqrt(jnp.sum((x - mean) ** 2, axis=-1, keepdims=True) / (d_model - 1))
    ref = gamma * (x - mean) / (std + 1e-6) + beta
    # Exact reciprocal + two-pass variance -> tight tolerance.
    err = float(jnp.max(jnp.abs(out - ref)))
    assert jnp.allclose(out, ref, atol=1e-5, rtol=1e-5), err

    print("KERNEL_OK")
</pallas_src>

<mosaic_0001>
module attributes {stable_mosaic.version = 11 : i64} {
  func.func @layernorm_kernel(%arg0: i32, %arg1: memref<16x128xf32, #tpu.memory_space<vmem>>, %arg2: memref<1x128xf32, #tpu.memory_space<vmem>>, %arg3: memref<1x128xf32, #tpu.memory_space<vmem>>, %arg4: memref<16x128xf32, #tpu.memory_space<vmem>>) attributes {dimension_semantics = [#tpu.dimension_semantics<parallel>], iteration_bounds = array<i64: 1>, scalar_prefetch = 0 : i64, scratch_operands = 0 : i64, tpu.core_type = #tpu.core_type<tc>, window_params = [{transform_indices = @transform_0, window_bounds = array<i64: 16, 128>}, {pipeline_mode = #tpu.pipeline_mode<synchronous>, transform_indices = @transform_1, window_bounds = array<i64: 1, 128>}, {pipeline_mode = #tpu.pipeline_mode<synchronous>, transform_indices = @transform_2, window_bounds = array<i64: 1, 128>}, {transform_indices = @transform_3, window_bounds = array<i64: 16, 128>}]} {
    %c0 = arith.constant 0 : index
    %c0_0 = arith.constant 0 : index
    %0 = vector.load %arg1[%c0, %c0_0] : memref<16x128xf32, #tpu.memory_space<vmem>>, vector<16x128xf32>
    %cst = arith.constant dense<0.000000e+00> : vector<16xf32>
    %1 = vector.multi_reduction <add>, %0, %cst [1] : vector<16x128xf32> to vector<16xf32>
    %2 = vector.shape_cast %1 : vector<16xf32> to vector<16x1xf32>
    %cst_1 = arith.constant 7.812500e-03 : f32
    %3 = vector.broadcast %cst_1 : f32 to vector<16x1xf32>
    %4 = arith.mulf %2, %3 : vector<16x1xf32>
    %5 = vector.broadcast %4 : vector<16x1xf32> to vector<16x128xf32>
    %6 = arith.subf %0, %5 : vector<16x128xf32>
    %7 = arith.mulf %6, %6 : vector<16x128xf32>
    %cst_2 = arith.constant dense<0.000000e+00> : vector<16xf32>
    %8 = vector.multi_reduction <add>, %7, %cst_2 [1] : vector<16x128xf32> to vector<16xf32>
    %9 = vector.shape_cast %8 : vector<16xf32> to vector<16x1xf32>
    %cst_3 = arith.constant 0.00787401571 : f32
    %10 = vector.broadcast %cst_3 : f32 to vector<16x1xf32>
    %11 = arith.mulf %9, %10 : vector<16x1xf32>
    %12 = math.sqrt %11 : vector<16x1xf32>
    %cst_4 = arith.constant 9.99999997E-7 : f32
    %13 = vector.broadcast %cst_4 : f32 to vector<16x1xf32>
    %14 = arith.addf %12, %13 : vector<16x1xf32>
    %cst_5 = arith.constant 1.000000e+00 : f32
    %15 = vector.broadcast %cst_5 : f32 to vector<16x1xf32>
    %16 = arith.divf %15, %14 : vector<16x1xf32>
    %c0_6 = arith.constant 0 : index
    %c0_7 = arith.constant 0 : index
    %17 = vector.load %arg2[%c0_6, %c0_7] : memref<1x128xf32, #tpu.memory_space<vmem>>, vector<1x128xf32>
    %c0_8 = arith.constant 0 : index
    %c0_9 = arith.constant 0 : index
    %18 = vector.load %arg3[%c0_8, %c0_9] : memref<1x128xf32, #tpu.memory_space<vmem>>, vector<1x128xf32>
    %19 = vector.broadcast %16 : vector<16x1xf32> to vector<16x128xf32>
    %20 = arith.mulf %6, %19 : vector<16x128xf32>
    %21 = vector.broadcast %17 : vector<1x128xf32> to vector<16x128xf32>
    %22 = arith.mulf %20, %21 : vector<16x128xf32>
    %23 = vector.broadcast %18 : vector<1x128xf32> to vector<16x128xf32>
    %24 = arith.addf %22, %23 : vector<16x128xf32>
    %c0_10 = arith.constant 0 : index
    %c0_11 = arith.constant 0 : index
    %25 = vector.load %arg4[%c0_10, %c0_11] : memref<16x128xf32, #tpu.memory_space<vmem>>, vector<16x128xf32>
    tpu.vector_store %arg4[%c0_10, %c0_11], %24 {strides = array<i32>} : memref<16x128xf32, #tpu.memory_space<vmem>>, vector<16x128xf32>,
    return
  }
  func.func @transform_0(%arg0: i32) -> (i32, i32) {
    %c0_i32 = arith.constant 0 : i32
    %c0_i32_0 = arith.constant 0 : i32
    return %arg0, %c0_i32 : i32, i32
  }
  func.func @transform_1(%arg0: i32) -> (i32, i32) {
    %c0_i32 = arith.constant 0 : i32
    %c0_i32_0 = arith.constant 0 : i32
    %c0_i32_1 = arith.constant 0 : i32
    return %c0_i32, %c0_i32_0 : i32, i32
  }
  func.func @transform_2(%arg0: i32) -> (i32, i32) {
    %c0_i32 = arith.constant 0 : i32
    %c0_i32_0 = arith.constant 0 : i32
    %c0_i32_1 = arith.constant 0 : i32
    return %c0_i32, %c0_i32_0 : i32, i32
  }
  func.func @transform_3(%arg0: i32) -> (i32, i32) {
    %c0_i32 = arith.constant 0 : i32
    %c0_i32_0 = arith.constant 0 : i32
    return %arg0, %c0_i32 : i32, i32
  }
}

</mosaic_0001>

<llo_original>
// kernel: tpu_custom_call.1
$region0: #{tpu_custom_call.1}
  #allocation0 [shape = 'u32[]', space=smem, size = 0x4, offset = 0x4, fixed_abs, tag = 'smem constant byte address 0x4 - core index']
  #allocation1 [shape = 'u32[144,128]{1,0:T(1,128)}', space=vmem, size = 0x12000, scoped, tag = 'internal scratch']
  %s0 = inlined_call_operand.hbm [shape: f32[16,128], index: 0, kind: input, shape index: {}]
  %s1 = inlined_call_operand.vmem [shape: f32[1,128], index: 1, kind: input, shape index: {}]
  %s2 = inlined_call_operand.vmem [shape: f32[1,128], index: 2, kind: input, shape index: {}]
  %s3 = inlined_call_operand.hbm [shape: f32[16,128], index: 3, kind: output, shape index: {}]
  %s4 = sld [smem:[#allocation0]]
  $region26: #{tpu_custom_call.1} parent=0
    _
  %s6 = ssub.s32 1, %s4
  %s7 = scalar_select 0, %s6, %s4
  $region1: #{tpu_custom_call.1} parent=0
    #allocation2 [shape = 'u8[8192]{0}', space=vmem, size = 0x2000, scoped, tag = 'input window, operand 0, single buffered']
    #allocation3 [shape = 's32[1]{0}', space=sflag, size = 0x4, scoped, tag = 'scoped memory for tpu_custom_call.1']
    #allocation4 [shape = 's32[1]{0}', space=sflag, size = 0x4, scoped, tag = 'scoped memory for tpu_custom_call.1']
    #allocation5 [shape = 'u8[8192]{0}', space=vmem, size = 0x2000, scoped, tag = 'output window, operand 0, single buffered']
    %8 = vsyncpa [#allocation3], 0
    %9 = vsyncpa [#allocation4], 0
    // Predicated region
    $region2: #{tpu_custom_call.1} parent=1 // pred_check
      _
    $region3: #{tpu_custom_call.1} parent=1 // pred_check_branch
      %11 = sbr.rel (0) target = $region5
    $region4: #{tpu_custom_call.1} parent=1 // pred_region
      %s13 = ssub.s32 256, 256
      %14 = vsyncadd [#allocation3], %s13
      %s15 = sshll.u32 [#allocation2], 4
      %s16 = int_to_ptr.vmem [resolvable:$true] %s15
      %21 = dma.hbm_to_vmem [thread:$0]  %s0, 256, %s16, [#allocation3], 128, 128, 8
    $region5: #{tpu_custom_call.1} parent=1 // pred_fallthru
      _
    // Predicated region
    $region6: #{tpu_custom_call.1} parent=1 // pred_check
      _
    $region7: #{tpu_custom_call.1} parent=1 // pred_check_branch
      %23 = sbr.rel (0) target = $region9
    $region8: #{tpu_custom_call.1} parent=1 // pred_region
      _
    $region9: #{tpu_custom_call.1} parent=1 // pred_fallthru
      _
    // Predicated region
    $region10: #{tpu_custom_call.1} parent=1 // pred_check
      _
    $region11: #{tpu_custom_call.1} parent=1 // pred_check_branch
      %25 = sbr.rel (0) target = $region13
    $region12: #{tpu_custom_call.1} parent=1 // pred_region
      _
    $region13: #{tpu_custom_call.1} parent=1 // pred_fallthru
      _
    // Predicated region
    $region14: #{tpu_custom_call.1} parent=1 // pred_check
      _
    $region15: #{tpu_custom_call.1} parent=1 // pred_check_branch
      %27 = sbr.rel (0) target = $region17
    $region16: #{tpu_custom_call.1} parent=1 // pred_region
      %28 = dma.done [#allocation3], 256
    $region17: #{tpu_custom_call.1} parent=1 // pred_fallthru
      _
    %v29 = vld [vmem:[#allocation2] sm:$0xff]
    %v30 = vld [vmem:[#allocation2 + $0x8] sm:$0xff]
    %31 = vadd.xlane.f32.xlu0 %v29
    %v32 = vpop.xlane.xlu0 %31
    %33 = vadd.xlane.f32.xlu0 %v30
    %v34 = vpop.xlane.xlu0 %33
    %v35 = vmul.f32 %v32, 0.0078125
    %v36 = vmul.f32 %v34, 0.0078125
    %v37 = vsub.f32 %v29, %v35
    %v38 = vsub.f32 %v30, %v36
    %v39 = vmul.f32 %v37, %v37
    %v40 = vmul.f32 %v38, %v38
    %41 = vadd.xlane.f32.xlu0 %v39
    %v42 = vpop.xlane.xlu0 %41
    %43 = vadd.xlane.f32.xlu0 %v40
    %v44 = vpop.xlane.xlu0 %43
    %v45 = vmul.f32 %v42, 0.007874016
    %v46 = vmul.f32 %v44, 0.007874016
    %v47 = vrsqrt.pop %v45
    %v48 = vmul.f32 %v45, %v47
    %vm49 = vcmp.eq.f32.partialorder %v45, inf
    %v50 = vsel %vm49, %v45, %v48
    %vm51 = vcmp.eq.f32.partialorder %v45, 0.0
    %v52 = vand.u32 %v45, 2147483648
    %v53 = vsel %vm51, %v52, %v50
    %v54 = vrsqrt.pop %v46
    %v55 = vmul.f32 %v46, %v54
    %vm56 = vcmp.eq.f32.partialorder %v46, inf
    %v57 = vsel %vm56, %v46, %v55
    %vm58 = vcmp.eq.f32.partialorder %v46, 0.0
    %v59 = vand.u32 %v46, 2147483648
    %v60 = vsel %vm58, %v59, %v57
    %v61 = vadd.f32 %v53, 1e-06
    %v62 = vadd.f32 %v60, 1e-06
    %v63 = vrcp.pop %v61
    %v64 = vmul.f32 1.0, %v63
    %v65 = vrcp.pop %v62
    %v66 = vmul.f32 1.0, %v65
    %v67 = vld [vmem:[%s1] sm:$0x1]
    %v68 = vld [vmem:[%s2] sm:$0x1]
    %v69 = vmul.f32 %v37, %v64
    %v70 = vmul.f32 %v38, %v66
    %v72 = vlaneseq
    %v73 = vshrl.u32 %v72, 7
    %v74 = vsub.s32 0, %v73
    %v75 = vrot.slane %v67, %v74
    %v77 = vmul.f32 %v69, %v75
    %v78 = vmul.f32 %v70, %v75
    %v80 = vlaneseq
    %v81 = vshrl.u32 %v80, 7
    %v82 = vsub.s32 0, %v81
    %v83 = vrot.slane %v68, %v82
    %v85 = vadd.f32 %v77, %v83
    %v86 = vadd.f32 %v78, %v83
    %87 = vst [vmem:[#allocation5] sm:$0xff] %v85
    %88 = vst [vmem:[#allocation5 + $0x8] sm:$0xff] %v86
    // Predicated region
    $region18: #{tpu_custom_call.1} parent=1 // pred_check
      _
    $region19: #{tpu_custom_call.1} parent=1 // pred_check_branch
      %90 = sbr.rel (0) target = $region21
    $region20: #{tpu_custom_call.1} parent=1 // pred_region
      %s92 = ssub.s32 256, 256
      %93 = vsyncadd [#allocation4], %s92
      %s94 = sshll.u32 [#allocation5], 4
      %s95 = int_to_ptr.vmem [resolvable:$true] %s94
      %100 = dma.vmem_to_hbm [thread:$0]  %s95, 256, %s3, [#allocation4], 128, 128, 8
    $region21: #{tpu_custom_call.1} parent=1 // pred_fallthru
      _
    // Predicated region
    $region22: #{tpu_custom_call.1} parent=1 // pred_check
      _
    $region23: #{tpu_custom_call.1} parent=1 // pred_check_branch
      %102 = sbr.rel (0) target = $region25
    $region24: #{tpu_custom_call.1} parent=1 // pred_region
      %103 = dma.done [#allocation4], 256
    $region25: #{tpu_custom_call.1} parent=1 // pred_fallthru
      _
    %104 = vsyncpa [#allocation3], 1
    %105 = vsyncpa [#allocation4], 1

</llo_original>
